<compile_context>
chip_gen: v7x
topology: tpu7x:2x2x1
jax: 0.10.0
libtpu: 0.0.40
codegen_flags: <defaults>
</compile_context>

<pallas_src>
import jax
import jax.numpy as jnp
from jax import lax
from jax.experimental import pallas as pl
from jax.experimental.pallas import tpu as pltpu


def _make_scl_kernel(temperature, batch_real, tq, tk, nk):
    inv_t = 1.0 / float(temperature)
    eps = 1e-5
    last_k = nk - 1
    padded_cols = (nk * tk) != batch_real   # padded key columns exist

    def kernel(q_ref, k_ref, tcol_ref, trow_ref, out_ref,
               strip_sc, m_sc, den_sc, num_sc, card_sc):
        # Grid-position reads hoisted to the kernel top level and captured by
        # the pl.when closures below (never call program_id inside them).
        qi = pl.program_id(0)          # query-tile index
        p = pl.program_id(1)           # 0: matmul + row-max pass, 1: accumulate
        kj = pl.program_id(2)          # key-tile index
        is_diag = qi == kj             # tq == tk, aligned -> only these tiles
                                       # intersect the diagonal

        # -------- pass 0: matmul into the strip cache + raw row max ---------
        @pl.when((p == 0) & (kj == 0))
        def _init_max():
            m_sc[...] = jnp.full(m_sc.shape, -jnp.inf, m_sc.dtype)

        @pl.when(p == 0)
        def _pass0():
            # Raw (untempered) similarity tile on the MXU; RHS consumed
            # transposed (contract the feature axes), f32 accumulation.
            s = lax.dot_general(q_ref[...], k_ref[...],
                                dimension_numbers=(((1,), (1,)), ((), ())),
                                preferred_element_type=jnp.float32)   # [tq, tk]
            strip_sc[kj] = s
            if padded_cols:
                col_ok = (kj * tk
                          + lax.broadcasted_iota(jnp.int32, (tq, tk), 1)
                          ) < batch_real
                s = jnp.where(col_ok, s, -jnp.inf)
            m_sc[...] = jnp.maximum(m_sc[...], jnp.max(s, axis=1, keepdims=True))

        # -------- pass 1: accumulate exp / masked-log / cardinality ---------
        @pl.when((p == 1) & (kj == 0))
        def _init_sums():
            den_sc[...] = jnp.zeros_like(den_sc)
            num_sc[...] = jnp.zeros_like(num_sc)
            card_sc[...] = jnp.zeros_like(card_sc)

        def _accumulate(on_diagonal):
            s = strip_sc[kj]                                           # [tq, tk]
            # 1/temperature folded into the exp argument (not the MXU input).
            e = jnp.exp(inv_t * (s - m_sc[...]))                       # [tq, tk]
            same = tcol_ref[...] == trow_ref[0]                        # [tq, tk]

            col_g = None
            if padded_cols or on_diagonal:
                col_g = kj * tk + lax.broadcasted_iota(jnp.int32, (tq, tk), 1)
            if padded_cols:
                col_ok = col_g < batch_real
                same = jnp.logical_and(same, col_ok)

            if on_diagonal:
                row_g = qi * tq + lax.broadcasted_iota(jnp.int32, (tq, tk), 0)
                off_diag = row_g != col_g
                mask_comb = jnp.logical_and(same, off_diag)
                den_mask = (jnp.logical_and(off_diag, col_ok)
                            if padded_cols else off_diag)
            else:
                mask_comb = same
                den_mask = col_ok if padded_cols else None

            if den_mask is None:
                den_sc[...] += jnp.sum(e, axis=1, keepdims=True)
            else:
                den_sc[...] += jnp.sum(jnp.where(den_mask, e, 0.0),
                                       axis=1, keepdims=True)
            # keep the reference's `+ 1e-5` inside the log for exact parity
            log_e = jnp.log(e + eps)
            num_sc[...] += jnp.sum(jnp.where(mask_comb, log_e, 0.0),
                                   axis=1, keepdims=True)
            card_sc[...] += jnp.sum(mask_comb.astype(jnp.float32),
                                    axis=1, keepdims=True)

        @pl.when((p == 1) & is_diag)
        def _acc_diag():
            _accumulate(True)

        @pl.when((p == 1) & jnp.logical_not(is_diag))
        def _acc_off_diag():
            _accumulate(False)

        # -------- finalize ---------------------------------------------------
        @pl.when((p == 1) & (kj == last_k))
        def _finalize():
            # denom = sum_{j != i, valid} exp_ij + eps*(B-1)   (exact eps handling)
            denom = den_sc[...] + eps * float(batch_real - 1)
            # sum(mask * -log(e/denom)) = card*log(denom) - sum(mask*log e)
            res = jnp.log(denom) - num_sc[...] / card_sc[...]          # [tq, 1]
            out_ref[...] = res.reshape(1, tq)                          # lane-dense store

    return kernel


def _round_up(n, m):
    return -(-n // m) * m


def _preferred_tile():
    """128 on v5e (4x 128x128 MXU, 16 MiB default scoped VMEM); 256 on v6e/v7x."""
    try:
        kind = jax.devices()[0].device_kind.lower()
    except Exception:
        return 256
    if "v5 lite" in kind or "v5lite" in kind or "v5e" in kind:
        return 128
    return 256


def supervised_contrastive_loss(projections, targets, temperature=0.07,
                                tile=None, use_bf16_matmul=False):
    """projections: [B, D] float (f32/bf16), targets: [B] int -> scalar f32 loss.

    NOTE: a class that appears exactly once in the batch divides by zero and
    yields NaN -- identical to the PyTorch reference.
    """
    B, D = projections.shape

    # ---- generation-aware tiling; pad instead of falling back to tiny tiles ----
    if tile is None:
        pref = _preferred_tile()
        tile = pref if B >= pref else max(8, _round_up(B, 8))
    t = int(tile)
    assert t % 8 == 0, "tile must be a multiple of 8 (sublane alignment)"
    B_pad = _round_up(B, t)
    nq = nk = B_pad // t
    # TODO(synk): on v7x (2 TensorCores) nq should be >= 2 for full dual-core
    # utilization; shrink `tile` for small batches if that matters.

    x = projections
    if use_bf16_matmul and x.dtype == jnp.float32:
        # bf16 MXU feeds with f32 accumulation (v6e/v7x); deviates from the f32
        # reference -- off by default.
        x = x.astype(jnp.bfloat16)

    # Zero-pad the feature dim to a lane multiple and the batch to a tile multiple.
    D_pad = _round_up(D, 128)
    pad_rows, pad_feat = B_pad - B, D_pad - D
    if pad_rows or pad_feat:
        x = jnp.pad(x, ((0, pad_rows), (0, pad_feat)))
    tgt = targets.astype(jnp.int32)
    if pad_rows:
        tgt = jnp.pad(tgt, (0, pad_rows))     # padded labels are masked in-kernel
    tcol = tgt.reshape(B_pad, 1)              # per-query-tile label column
    trow = tgt.reshape(nk, 1, t)              # per-key-tile label row (lane axis)

    kernel = _make_scl_kernel(temperature, B, t, t, nk)

    # ---- VMEM budget (raise v5e's 16 MiB default; stay under v7x's 64 MiB) ----
    in_bytes = 2 * 2 * t * D_pad * x.dtype.itemsize      # double-buffered q/k tiles
    strip_bytes = nk * t * t * 4                          # cached similarity strip
    misc_bytes = (4 * t + 2 * (B_pad + t)) * 4 + (1 << 20)
    vmem_limit = min(64 << 20,
                     max(32 << 20, int(1.5 * (in_bytes + strip_bytes + misc_bytes))))

    per_sample = pl.pallas_call(
        kernel,
        out_shape=jax.ShapeDtypeStruct((nq, t), jnp.float32),
        grid_spec=pltpu.PrefetchScalarGridSpec(
            num_scalar_prefetch=0,
            # (query tiles, pass 0=matmul+rowmax / 1=accumulate, key tiles)
            grid=(nq, 2, nk),
            in_specs=[
                pl.BlockSpec((t, D_pad), lambda i, p, k: (i, 0)),        # query rows
                # K is only consumed in pass 0; pin block 0 during pass 1 so
                # the pipeline does not re-stream K from HBM a second time.
                pl.BlockSpec((t, D_pad), lambda i, p, k: ((1 - p) * k, 0)),
                pl.BlockSpec((t, 1), lambda i, p, k: (i, 0)),            # labels (col)
                pl.BlockSpec((1, 1, t), lambda i, p, k: (k, 0, 0)),      # labels (row)
            ],
            out_specs=pl.BlockSpec((1, t), lambda i, p, k: (i, 0)),
            scratch_shapes=[
                pltpu.VMEM((nk, t, t), jnp.float32),   # similarity strip cache
                pltpu.VMEM((t, 1), jnp.float32),       # running raw row max
                pltpu.VMEM((t, 1), jnp.float32),       # denominator sum
                pltpu.VMEM((t, 1), jnp.float32),       # numerator (masked log) sum
                pltpu.VMEM((t, 1), jnp.float32),       # cardinality sum
            ]),
        compiler_params=pltpu.CompilerParams(
            dimension_semantics=("parallel", "arbitrary", "arbitrary"),
            vmem_limit_bytes=vmem_limit),
    )(x, x, tcol, trow)

    # Padded rows are dropped before the mean (their values may be NaN).
    return jnp.mean(per_sample.reshape(-1)[:B])


def _reference_loss(projections, targets, temperature=0.07):
    p = projections.astype(jnp.float32)
    s = (p @ p.T) / temperature
    e = jnp.exp(s - jnp.max(s, axis=1, keepdims=True)) + 1e-5
    mask_sim = (targets[:, None] == targets[None, :]).astype(jnp.float32)
    mask_out = 1.0 - jnp.eye(p.shape[0], dtype=jnp.float32)
    mask_comb = mask_sim * mask_out
    card = jnp.sum(mask_comb, axis=1)
    log_prob = -jnp.log(e / jnp.sum(e * mask_out, axis=1, keepdims=True))
    per_sample = jnp.sum(log_prob * mask_comb, axis=1) / card
    return jnp.mean(per_sample)


if __name__ == "__main__":
    key = jax.random.PRNGKey(0)
    k1, k2, k3 = jax.random.split(key, 3)

    def _check(proj, tgts, **kw):
        loss = jax.block_until_ready(
            supervised_contrastive_loss(proj, tgts, 0.07, **kw))
        ref = _reference_loss(proj, tgts, 0.07)
        assert jnp.isfinite(loss), "loss is not finite"
        assert jnp.allclose(loss, ref, rtol=1e-4, atol=1e-5), (loss, ref)

    # Case 1: single-tile path (B=8, D=32); every class appears >= 2 times.
    proj = jax.random.normal(k1, (8, 32), dtype=jnp.float32)
    proj = proj / jnp.linalg.norm(proj, axis=1, keepdims=True)
    tgts = jnp.array([0, 1, 0, 1, 2, 2, 0, 1], dtype=jnp.int32)
    _check(proj, tgts)

    # Case 2: multi-tile path (B=16 with 8x8 tiles -> 2x2 tiles): exercises the
    # VMEM strip cache, the two-pass reduction and the diag/off-diag gating.
    proj2 = jax.random.normal(k2, (16, 32), dtype=jnp.float32)
    proj2 = proj2 / jnp.linalg.norm(proj2, axis=1, keepdims=True)
    tgts2 = jnp.arange(16, dtype=jnp.int32) % 4
    _check(proj2, tgts2, tile=8)

    # Case 3: ragged batch (B=12, tile=8 -> padded to 16): exercises the
    # padded row/column masking path.
    proj3 = jax.random.normal(k3, (12, 32), dtype=jnp.float32)
    proj3 = proj3 / jnp.linalg.norm(proj3, axis=1, keepdims=True)
    tgts3 = jnp.arange(12, dtype=jnp.int32) % 3
    _check(proj3, tgts3, tile=8)

    print("KERNEL_OK")
</pallas_src>

<mosaic_0001>
module attributes {stable_mosaic.version = 11 : i64} {
  func.func @kernel(%arg0: i32, %arg1: i32, %arg2: i32, %arg3: memref<8x128xf32, #tpu.memory_space<vmem>>, %arg4: memref<8x128xf32, #tpu.memory_space<vmem>>, %arg5: memref<8x1xi32, #tpu.memory_space<vmem>>, %arg6: memref<1x1x8xi32, #tpu.memory_space<vmem>>, %arg7: memref<1x8xf32, #tpu.memory_space<vmem>>, %arg8: memref<1x8x8xf32, #tpu.memory_space<vmem>>, %arg9: memref<8x1xf32, #tpu.memory_space<vmem>>, %arg10: memref<8x1xf32, #tpu.memory_space<vmem>>, %arg11: memref<8x1xf32, #tpu.memory_space<vmem>>, %arg12: memref<8x1xf32, #tpu.memory_space<vmem>>) attributes {dimension_semantics = [#tpu.dimension_semantics<parallel>, #tpu.dimension_semantics<arbitrary>, #tpu.dimension_semantics<arbitrary>], iteration_bounds = array<i64: 1, 2, 1>, scalar_prefetch = 0 : i64, scratch_operands = 5 : i64, tpu.core_type = #tpu.core_type<tc>, window_params = [{transform_indices = @transform_0, window_bounds = array<i64: 8, 128>}, {transform_indices = @transform_1, window_bounds = array<i64: 8, 128>}, {transform_indices = @transform_2, window_bounds = array<i64: 8, 1>}, {transform_indices = @transform_3, window_bounds = array<i64: 1, 1, 8>}, {transform_indices = @transform_4, window_bounds = array<i64: 1, 8>}]} {
    %0 = arith.cmpi eq, %arg0, %arg2 : i32
    %c0_i32 = arith.constant 0 : i32
    %1 = arith.cmpi eq, %arg1, %c0_i32 : i32
    %c0_i32_0 = arith.constant 0 : i32
    %2 = arith.cmpi eq, %arg2, %c0_i32_0 : i32
    %3 = arith.andi %1, %2 : i1
    %4 = arith.extui %3 : i1 to i32
    %c0_i32_1 = arith.constant 0 : i32
    %5 = arith.cmpi ne, %4, %c0_i32_1 : i32
    scf.if %5 {
      %cst = arith.constant 0xFF800000 : f32
      %28 = vector.broadcast %cst : f32 to vector<8x1xf32>
      %c0 = arith.constant 0 : index
      %c0_13 = arith.constant 0 : index
      %29 = vector.load %arg9[%c0, %c0_13] : memref<8x1xf32, #tpu.memory_space<vmem>>, vector<8x1xf32>
      tpu.vector_store %arg9[%c0, %c0_13], %28 {strides = array<i32>} : memref<8x1xf32, #tpu.memory_space<vmem>>, vector<8x1xf32>,
    } else {
    }
    %c0_i32_2 = arith.constant 0 : i32
    %6 = arith.cmpi eq, %arg1, %c0_i32_2 : i32
    %7 = arith.extui %6 : i1 to i32
    %c0_i32_3 = arith.constant 0 : i32
    %8 = arith.cmpi ne, %7, %c0_i32_3 : i32
    scf.if %8 {
      %c0 = arith.constant 0 : index
      %c0_13 = arith.constant 0 : index
      %28 = vector.load %arg3[%c0, %c0_13] : memref<8x128xf32, #tpu.memory_space<vmem>>, vector<8x128xf32>
      %c0_14 = arith.constant 0 : index
      %c0_15 = arith.constant 0 : index
      %29 = vector.load %arg4[%c0_14, %c0_15] : memref<8x128xf32, #tpu.memory_space<vmem>>, vector<8x128xf32>
      %cst = arith.constant dense<0.000000e+00> : vector<8x8xf32>
      %30 = tpu.matmul %28, %29, %cst {dimension_numbers = #tpu.dot_dimension_numbers<[1], [1], [0], [0], [0, 0, 1, 0], [], []>} : vector<8x128xf32>, vector<8x128xf32>, vector<8x8xf32> -> vector<8x8xf32>
      %31 = arith.index_cast %arg2 : i32 to index
      %c0_16 = arith.constant 0 : index
      %c0_17 = arith.constant 0 : index
      %32 = vector.load %arg8[%31, %c0_16, %c0_17] : memref<1x8x8xf32, #tpu.memory_space<vmem>>, vector<1x8x8xf32>
      %33 = vector.shape_cast %32 : vector<1x8x8xf32> to vector<8x8xf32>
      %34 = vector.shape_cast %30 : vector<8x8xf32> to vector<1x8x8xf32>
      tpu.vector_store %arg8[%31, %c0_16, %c0_17], %34 {strides = array<i32>} : memref<1x8x8xf32, #tpu.memory_space<vmem>>, vector<1x8x8xf32>,
      %c0_18 = arith.constant 0 : index
      %c0_19 = arith.constant 0 : index
      %35 = vector.load %arg9[%c0_18, %c0_19] : memref<8x1xf32, #tpu.memory_space<vmem>>, vector<8x1xf32>
      %cst_20 = arith.constant dense<0xFF800000> : vector<8xf32>
      %36 = vector.multi_reduction <maximumf>, %30, %cst_20 [1] : vector<8x8xf32> to vector<8xf32>
      %37 = vector.shape_cast %36 : vector<8xf32> to vector<8x1xf32>
      %38 = arith.maximumf %35, %37 : vector<8x1xf32>
      %c0_21 = arith.constant 0 : index
      %c0_22 = arith.constant 0 : index
      %39 = vector.load %arg9[%c0_21, %c0_22] : memref<8x1xf32, #tpu.memory_space<vmem>>, vector<8x1xf32>
      tpu.vector_store %arg9[%c0_21, %c0_22], %38 {strides = array<i32>} : memref<8x1xf32, #tpu.memory_space<vmem>>, vector<8x1xf32>,
    } else {
    }
    %c1_i32 = arith.constant 1 : i32
    %9 = arith.cmpi eq, %arg1, %c1_i32 : i32
    %c0_i32_4 = arith.constant 0 : i32
    %10 = arith.cmpi eq, %arg2, %c0_i32_4 : i32
    %11 = arith.andi %9, %10 : i1
    %12 = arith.extui %11 : i1 to i32
    %c0_i32_5 = arith.constant 0 : i32
    %13 = arith.cmpi ne, %12, %c0_i32_5 : i32
    scf.if %13 {
      %cst = arith.constant 0.000000e+00 : f32
      %28 = vector.broadcast %cst : f32 to vector<8x1xf32>
      %c0 = arith.constant 0 : index
      %c0_13 = arith.constant 0 : index
      %29 = vector.load %arg10[%c0, %c0_13] : memref<8x1xf32, #tpu.memory_space<vmem>>, vector<8x1xf32>
      tpu.vector_store %arg10[%c0, %c0_13], %28 {strides = array<i32>} : memref<8x1xf32, #tpu.memory_space<vmem>>, vector<8x1xf32>,
      %cst_14 = arith.constant 0.000000e+00 : f32
      %30 = vector.broadcast %cst_14 : f32 to vector<8x1xf32>
      %c0_15 = arith.constant 0 : index
      %c0_16 = arith.constant 0 : index
      %31 = vector.load %arg11[%c0_15, %c0_16] : memref<8x1xf32, #tpu.memory_space<vmem>>, vector<8x1xf32>
      tpu.vector_store %arg11[%c0_15, %c0_16], %30 {strides = array<i32>} : memref<8x1xf32, #tpu.memory_space<vmem>>, vector<8x1xf32>,
      %cst_17 = arith.constant 0.000000e+00 : f32
      %32 = vector.broadcast %cst_17 : f32 to vector<8x1xf32>
      %c0_18 = arith.constant 0 : index
      %c0_19 = arith.constant 0 : index
      %33 = vector.load %arg12[%c0_18, %c0_19] : memref<8x1xf32, #tpu.memory_space<vmem>>, vector<8x1xf32>
      tpu.vector_store %arg12[%c0_18, %c0_19], %32 {strides = array<i32>} : memref<8x1xf32, #tpu.memory_space<vmem>>, vector<8x1xf32>,
    } else {
    }
    %c1_i32_6 = arith.constant 1 : i32
    %14 = arith.cmpi eq, %arg1, %c1_i32_6 : i32
    %15 = arith.andi %14, %0 : i1
    %16 = arith.extui %15 : i1 to i32
    %c0_i32_7 = arith.constant 0 : i32
    %17 = arith.cmpi ne, %16, %c0_i32_7 : i32
    scf.if %17 {
      %28 = arith.index_cast %arg2 : i32 to index
      %c0 = arith.constant 0 : index
      %c0_13 = arith.constant 0 : index
      %29 = vector.load %arg8[%28, %c0, %c0_13] : memref<1x8x8xf32, #tpu.memory_space<vmem>>, vector<1x8x8xf32>
      %30 = vector.shape_cast %29 : vector<1x8x8xf32> to vector<8x8xf32>
      %c0_14 = arith.constant 0 : index
      %c0_15 = arith.constant 0 : index
      %31 = vector.load %arg9[%c0_14, %c0_15] : memref<8x1xf32, #tpu.memory_space<vmem>>, vector<8x1xf32>
      %32 = vector.broadcast %31 : vector<8x1xf32> to vector<8x8xf32>
      %33 = arith.subf %30, %32 : vector<8x8xf32>
      %cst = arith.constant 14.2857141 : f32
      %34 = vector.broadcast %cst : f32 to vector<8x8xf32>
      %35 = arith.mulf %34, %33 : vector<8x8xf32>
      %36 = math.exp %35 : vector<8x8xf32>
      %c0_16 = arith.constant 0 : index
      %c0_17 = arith.constant 0 : index
      %37 = vector.load %arg5[%c0_16, %c0_17] : memref<8x1xi32, #tpu.memory_space<vmem>>, vector<8x1xi32>
      %c0_18 = arith.constant 0 : index
      %c0_19 = arith.constant 0 : index
      %c0_20 = arith.constant 0 : index
      %38 = vector.load %arg6[%c0_18, %c0_19, %c0_20] : memref<1x1x8xi32, #tpu.memory_space<vmem>>, vector<1x1x8xi32>
      %39 = vector.shape_cast %38 : vector<1x1x8xi32> to vector<1x8xi32>
      %40 = vector.broadcast %37 : vector<8x1xi32> to vector<8x8xi32>
      %41 = vector.broadcast %39 : vector<1x8xi32> to vector<8x8xi32>
      %42 = arith.cmpi eq, %40, %41 : vector<8x8xi32>
      %c8_i32 = arith.constant 8 : i32
      %43 = arith.muli %arg2, %c8_i32 : i32
      %44 = tpu.iota {dimensions = array<i32: 1>} : vector<8x8xi32>
      %45 = vector.broadcast %43 : i32 to vector<8x8xi32>
      %46 = arith.addi %45, %44 : vector<8x8xi32>
      %c8_i32_21 = arith.constant 8 : i32
      %47 = arith.muli %arg0, %c8_i32_21 : i32
      %48 = tpu.iota {dimensions = array<i32: 0>} : vector<8x8xi32>
      %49 = vector.broadcast %47 : i32 to vector<8x8xi32>
      %50 = arith.addi %49, %48 : vector<8x8xi32>
      %51 = arith.cmpi ne, %50, %46 : vector<8x8xi32>
      %52 = arith.andi %42, %51 : vector<8x8xi1>
      %c0_22 = arith.constant 0 : index
      %c0_23 = arith.constant 0 : index
      %53 = vector.load %arg10[%c0_22, %c0_23] : memref<8x1xf32, #tpu.memory_space<vmem>>, vector<8x1xf32>
      %cst_24 = arith.constant 0.000000e+00 : f32
      %54 = vector.broadcast %cst_24 : f32 to vector<8x8xf32>
      %55 = arith.select %51, %36, %54 : vector<8x8xi1>, vector<8x8xf32>
      %cst_25 = arith.constant dense<0.000000e+00> : vector<8xf32>
      %56 = vector.multi_reduction <add>, %55, %cst_25 [1] : vector<8x8xf32> to vector<8xf32>
      %57 = vector.shape_cast %56 : vector<8xf32> to vector<8x1xf32>
      %58 = arith.addf %53, %57 : vector<8x1xf32>
      %c0_26 = arith.constant 0 : index
      %c0_27 = arith.constant 0 : index
      %59 = vector.load %arg10[%c0_26, %c0_27] : memref<8x1xf32, #tpu.memory_space<vmem>>, vector<8x1xf32>
      tpu.vector_store %arg10[%c0_26, %c0_27], %58 {strides = array<i32>} : memref<8x1xf32, #tpu.memory_space<vmem>>, vector<8x1xf32>,
      %cst_28 = arith.constant 9.99999974E-6 : f32
      %60 = vector.broadcast %cst_28 : f32 to vector<8x8xf32>
      %61 = arith.addf %36, %60 : vector<8x8xf32>
      %62 = math.log %61 : vector<8x8xf32>
      %c0_29 = arith.constant 0 : index
      %c0_30 = arith.constant 0 : index
      %63 = vector.load %arg11[%c0_29, %c0_30] : memref<8x1xf32, #tpu.memory_space<vmem>>, vector<8x1xf32>
      %cst_31 = arith.constant 0.000000e+00 : f32
      %64 = vector.broadcast %cst_31 : f32 to vector<8x8xf32>
      %65 = arith.select %52, %62, %64 : vector<8x8xi1>, vector<8x8xf32>
      %cst_32 = arith.constant dense<0.000000e+00> : vector<8xf32>
      %66 = vector.multi_reduction <add>, %65, %cst_32 [1] : vector<8x8xf32> to vector<8xf32>
      %67 = vector.shape_cast %66 : vector<8xf32> to vector<8x1xf32>
      %68 = arith.addf %63, %67 : vector<8x1xf32>
      %c0_33 = arith.constant 0 : index
      %c0_34 = arith.constant 0 : index
      %69 = vector.load %arg11[%c0_33, %c0_34] : memref<8x1xf32, #tpu.memory_space<vmem>>, vector<8x1xf32>
      tpu.vector_store %arg11[%c0_33, %c0_34], %68 {strides = array<i32>} : memref<8x1xf32, #tpu.memory_space<vmem>>, vector<8x1xf32>,
      %c0_35 = arith.constant 0 : index
      %c0_36 = arith.constant 0 : index
      %70 = vector.load %arg12[%c0_35, %c0_36] : memref<8x1xf32, #tpu.memory_space<vmem>>, vector<8x1xf32>
      %71 = arith.extui %52 : vector<8x8xi1> to vector<8x8xi32>
      %72 = arith.sitofp %71 : vector<8x8xi32> to vector<8x8xf32>
      %cst_37 = arith.constant dense<0.000000e+00> : vector<8xf32>
      %73 = vector.multi_reduction <add>, %72, %cst_37 [1] : vector<8x8xf32> to vector<8xf32>
      %74 = vector.shape_cast %73 : vector<8xf32> to vector<8x1xf32>
      %75 = arith.addf %70, %74 : vector<8x1xf32>
      %c0_38 = arith.constant 0 : index
      %c0_39 = arith.constant 0 : index
      %76 = vector.load %arg12[%c0_38, %c0_39] : memref<8x1xf32, #tpu.memory_space<vmem>>, vector<8x1xf32>
      tpu.vector_store %arg12[%c0_38, %c0_39], %75 {strides = array<i32>} : memref<8x1xf32, #tpu.memory_space<vmem>>, vector<8x1xf32>,
    } else {
    }
    %c1_i32_8 = arith.constant 1 : i32
    %18 = arith.cmpi eq, %arg1, %c1_i32_8 : i32
    %true = arith.constant true
    %19 = arith.xori %0, %true : i1
    %20 = arith.andi %18, %19 : i1
    %21 = arith.extui %20 : i1 to i32
    %c0_i32_9 = arith.constant 0 : i32
    %22 = arith.cmpi ne, %21, %c0_i32_9 : i32
    scf.if %22 {
      %28 = arith.index_cast %arg2 : i32 to index
      %c0 = arith.constant 0 : index
      %c0_13 = arith.constant 0 : index
      %29 = vector.load %arg8[%28, %c0, %c0_13] : memref<1x8x8xf32, #tpu.memory_space<vmem>>, vector<1x8x8xf32>
      %30 = vector.shape_cast %29 : vector<1x8x8xf32> to vector<8x8xf32>
      %c0_14 = arith.constant 0 : index
      %c0_15 = arith.constant 0 : index
      %31 = vector.load %arg9[%c0_14, %c0_15] : memref<8x1xf32, #tpu.memory_space<vmem>>, vector<8x1xf32>
      %32 = vector.broadcast %31 : vector<8x1xf32> to vector<8x8xf32>
      %33 = arith.subf %30, %32 : vector<8x8xf32>
      %cst = arith.constant 14.2857141 : f32
      %34 = vector.broadcast %cst : f32 to vector<8x8xf32>
      %35 = arith.mulf %34, %33 : vector<8x8xf32>
      %36 = math.exp %35 : vector<8x8xf32>
      %c0_16 = arith.constant 0 : index
      %c0_17 = arith.constant 0 : index
      %37 = vector.load %arg5[%c0_16, %c0_17] : memref<8x1xi32, #tpu.memory_space<vmem>>, vector<8x1xi32>
      %c0_18 = arith.constant 0 : index
      %c0_19 = arith.constant 0 : index
      %c0_20 = arith.constant 0 : index
      %38 = vector.load %arg6[%c0_18, %c0_19, %c0_20] : memref<1x1x8xi32, #tpu.memory_space<vmem>>, vector<1x1x8xi32>
      %39 = vector.shape_cast %38 : vector<1x1x8xi32> to vector<1x8xi32>
      %40 = vector.broadcast %37 : vector<8x1xi32> to vector<8x8xi32>
      %41 = vector.broadcast %39 : vector<1x8xi32> to vector<8x8xi32>
      %42 = arith.cmpi eq, %40, %41 : vector<8x8xi32>
      %c0_21 = arith.constant 0 : index
      %c0_22 = arith.constant 0 : index
      %43 = vector.load %arg10[%c0_21, %c0_22] : memref<8x1xf32, #tpu.memory_space<vmem>>, vector<8x1xf32>
      %cst_23 = arith.constant dense<0.000000e+00> : vector<8xf32>
      %44 = vector.multi_reduction <add>, %36, %cst_23 [1] : vector<8x8xf32> to vector<8xf32>
      %45 = vector.shape_cast %44 : vector<8xf32> to vector<8x1xf32>
      %46 = arith.addf %43, %45 : vector<8x1xf32>
      %c0_24 = arith.constant 0 : index
      %c0_25 = arith.constant 0 : index
      %47 = vector.load %arg10[%c0_24, %c0_25] : memref<8x1xf32, #tpu.memory_space<vmem>>, vector<8x1xf32>
      tpu.vector_store %arg10[%c0_24, %c0_25], %46 {strides = array<i32>} : memref<8x1xf32, #tpu.memory_space<vmem>>, vector<8x1xf32>,
      %cst_26 = arith.constant 9.99999974E-6 : f32
      %48 = vector.broadcast %cst_26 : f32 to vector<8x8xf32>
      %49 = arith.addf %36, %48 : vector<8x8xf32>
      %50 = math.log %49 : vector<8x8xf32>
      %c0_27 = arith.constant 0 : index
      %c0_28 = arith.constant 0 : index
      %51 = vector.load %arg11[%c0_27, %c0_28] : memref<8x1xf32, #tpu.memory_space<vmem>>, vector<8x1xf32>
      %cst_29 = arith.constant 0.000000e+00 : f32
      %52 = vector.broadcast %cst_29 : f32 to vector<8x8xf32>
      %53 = arith.select %42, %50, %52 : vector<8x8xi1>, vector<8x8xf32>
      %cst_30 = arith.constant dense<0.000000e+00> : vector<8xf32>
      %54 = vector.multi_reduction <add>, %53, %cst_30 [1] : vector<8x8xf32> to vector<8xf32>
      %55 = vector.shape_cast %54 : vector<8xf32> to vector<8x1xf32>
      %56 = arith.addf %51, %55 : vector<8x1xf32>
      %c0_31 = arith.constant 0 : index
      %c0_32 = arith.constant 0 : index
      %57 = vector.load %arg11[%c0_31, %c0_32] : memref<8x1xf32, #tpu.memory_space<vmem>>, vector<8x1xf32>
      tpu.vector_store %arg11[%c0_31, %c0_32], %56 {strides = array<i32>} : memref<8x1xf32, #tpu.memory_space<vmem>>, vector<8x1xf32>,
      %c0_33 = arith.constant 0 : index
      %c0_34 = arith.constant 0 : index
      %58 = vector.load %arg12[%c0_33, %c0_34] : memref<8x1xf32, #tpu.memory_space<vmem>>, vector<8x1xf32>
      %59 = arith.extui %42 : vector<8x8xi1> to vector<8x8xi32>
      %60 = arith.sitofp %59 : vector<8x8xi32> to vector<8x8xf32>
      %cst_35 = arith.constant dense<0.000000e+00> : vector<8xf32>
      %61 = vector.multi_reduction <add>, %60, %cst_35 [1] : vector<8x8xf32> to vector<8xf32>
      %62 = vector.shape_cast %61 : vector<8xf32> to vector<8x1xf32>
      %63 = arith.addf %58, %62 : vector<8x1xf32>
      %c0_36 = arith.constant 0 : index
      %c0_37 = arith.constant 0 : index
      %64 = vector.load %arg12[%c0_36, %c0_37] : memref<8x1xf32, #tpu.memory_space<vmem>>, vector<8x1xf32>
      tpu.vector_store %arg12[%c0_36, %c0_37], %63 {strides = array<i32>} : memref<8x1xf32, #tpu.memory_space<vmem>>, vector<8x1xf32>,
    } else {
    }
    %c1_i32_10 = arith.constant 1 : i32
    %23 = arith.cmpi eq, %arg1, %c1_i32_10 : i32
    %c0_i32_11 = arith.constant 0 : i32
    %24 = arith.cmpi eq, %arg2, %c0_i32_11 : i32
    %25 = arith.andi %23, %24 : i1
    %26 = arith.extui %25 : i1 to i32
    %c0_i32_12 = arith.constant 0 : i32
    %27 = arith.cmpi ne, %26, %c0_i32_12 : i32
    scf.if %27 {
      %c0 = arith.constant 0 : index
      %c0_13 = arith.constant 0 : index
      %28 = vector.load %arg10[%c0, %c0_13] : memref<8x1xf32, #tpu.memory_space<vmem>>, vector<8x1xf32>
      %cst = arith.constant 7.000000e-05 : f32
      %29 = vector.broadcast %cst : f32 to vector<8x1xf32>
      %30 = arith.addf %28, %29 : vector<8x1xf32>
      %31 = math.log %30 : vector<8x1xf32>
      %c0_14 = arith.constant 0 : index
      %c0_15 = arith.constant 0 : index
      %32 = vector.load %arg11[%c0_14, %c0_15] : memref<8x1xf32, #tpu.memory_space<vmem>>, vector<8x1xf32>
      %c0_16 = arith.constant 0 : index
      %c0_17 = arith.constant 0 : index
      %33 = vector.load %arg12[%c0_16, %c0_17] : memref<8x1xf32, #tpu.memory_space<vmem>>, vector<8x1xf32>
      %34 = arith.divf %32, %33 : vector<8x1xf32>
      %35 = arith.subf %31, %34 : vector<8x1xf32>
      %36 = vector.shape_cast %35 : vector<8x1xf32> to vector<1x8xf32>
      %c0_18 = arith.constant 0 : index
      %c0_19 = arith.constant 0 : index
      %37 = vector.load %arg7[%c0_18, %c0_19] : memref<1x8xf32, #tpu.memory_space<vmem>>, vector<1x8xf32>
      tpu.vector_store %arg7[%c0_18, %c0_19], %36 {strides = array<i32>} : memref<1x8xf32, #tpu.memory_space<vmem>>, vector<1x8xf32>,
    } else {
    }
    return
  }
  func.func @transform_0(%arg0: i32, %arg1: i32, %arg2: i32) -> (i32, i32) {
    %c0_i32 = arith.constant 0 : i32
    %c0_i32_0 = arith.constant 0 : i32
    return %arg0, %c0_i32 : i32, i32
  }
  func.func @transform_1(%arg0: i32, %arg1: i32, %arg2: i32) -> (i32, i32) {
    %c1_i32 = arith.constant 1 : i32
    %0 = arith.subi %c1_i32, %arg1 : i32
    %1 = arith.muli %0, %arg2 : i32
    %c0_i32 = arith.constant 0 : i32
    %c0_i32_0 = arith.constant 0 : i32
    return %1, %c0_i32 : i32, i32
  }
  func.func @transform_2(%arg0: i32, %arg1: i32, %arg2: i32) -> (i32, i32) {
    %c0_i32 = arith.constant 0 : i32
    %c0_i32_0 = arith.constant 0 : i32
    return %arg0, %c0_i32 : i32, i32
  }
  func.func @transform_3(%arg0: i32, %arg1: i32, %arg2: i32) -> (i32, i32, i32) {
    %c0_i32 = arith.constant 0 : i32
    %c0_i32_0 = arith.constant 0 : i32
    %c0_i32_1 = arith.constant 0 : i32
    return %arg2, %c0_i32, %c0_i32_0 : i32, i32, i32
  }
  func.func @transform_4(%arg0: i32, %arg1: i32, %arg2: i32) -> (i32, i32) {
    %c0_i32 = arith.constant 0 : i32
    %c0_i32_0 = arith.constant 0 : i32
    return %arg0, %c0_i32 : i32, i32
  }
}

</mosaic_0001>

<llo_original>
// kernel: tpu_custom_call.1
$region0: #{tpu_custom_call.1}
  #allocation0 [shape = 'u32[]', space=smem, size = 0x4, offset = 0x4, fixed_abs, tag = 'smem constant byte address 0x4 - core index']
  #allocation1 [shape = 'u32[144,128]{1,0:T(1,128)}', space=vmem, size = 0x12000, scoped, tag = 'internal scratch']
  #allocation2 [shape = 'f32[1,8,8]{2,1,0:T(8,128)}', space=vmem, size = 0x1000, scoped, tag = 'scratch operand']
  #allocation3 [shape = 'f32[8,1]{1,0:T(8,128)}', space=vmem, size = 0x1000, scoped, tag = 'scratch operand']
  #allocation4 [shape = 'f32[8,1]{1,0:T(8,128)}', space=vmem, size = 0x1000, scoped, tag = 'scratch operand']
  #allocation5 [shape = 'f32[8,1]{1,0:T(8,128)}', space=vmem, size = 0x1000, scoped, tag = 'scratch operand']
  #allocation6 [shape = 'f32[8,1]{1,0:T(8,128)}', space=vmem, size = 0x1000, scoped, tag = 'scratch operand']
  %s0 = inlined_call_operand.vmem [shape: f32[8,128], index: 0, kind: input, shape index: {}]
  %s1 = inlined_call_operand.hbm [shape: f32[8,128], index: 1, kind: input, shape index: {}]
  %s2 = inlined_call_operand.vmem [shape: s32[8,1], index: 2, kind: input, shape index: {}]
  %s3 = inlined_call_operand.vmem [shape: s32[1,1,8], index: 3, kind: input, shape index: {}]
  %s4 = inlined_call_operand.hbm [shape: f32[1,8], index: 4, kind: output, shape index: {}]
  %s5 = sld [smem:[#allocation0]]
  $region77: #{tpu_custom_call.1} parent=0
    _
  %s7 = ssub.s32 1, %s5
  %s8 = scalar_select 0, %s7, %s5
  $region1: #{tpu_custom_call.1} parent=0
    #allocation7 [shape = 'u8[8192]{0}', space=vmem, size = 0x2000, scoped, tag = 'input window, operand 1']
    #allocation8 [shape = 's32[2]{0}', space=sflag, size = 0x8, scoped, tag = 'scoped memory for tpu_custom_call.1']
    #allocation9 [shape = 's32[2]{0}', space=sflag, size = 0x8, scoped, tag = 'scoped memory for tpu_custom_call.1']
    #allocation10 [shape = 'u8[512]{0}', space=vmem, size = 0x400, scoped, tag = 'output window, operand 0, single buffered']
    %9 = vsyncpa [#allocation8], 0
    %s10 = scalar_lea.sflag [#allocation8], 1
    %11 = vsyncpa %s10, 0
    %12 = vsyncpa [#allocation9], 0
    loop: start=0, step=1, limit=4
    $region2: #{tpu_custom_call.1} parent=1 // loop_pre_header
      _
    $region3: #{tpu_custom_call.1} parent=1 // loop_header
      %s14 = sphi 0, %s18
      %p15 = scmp.ge.s32.totalorder %s14, 4
      %s21 = sphi 0, %s40
      %s22 = sphi 0, %s36
      %s23 = sphi 0, %s32
      %s24 = sphi 0, %s21
      %s25 = sphi 0, %s22
      %s26 = sphi 0, %s23
      %s27 = sphi 0, %s24
      %s28 = sphi 0, %s25
      %s29 = sphi 0, %s26
      %s43 = sphi 0, %s45
      %s46 = sphi 0, %s43
      %s47 = sphi 0, %s46
      %s63 = sphi 0, %s47
      %s73 = sphi 0, %s75
      %s76 = sphi 0, %s73
      %s77 = sphi 0, %s76
      %s93 = sphi 0, %s77
      %s99 = sphi 0, %s101
      %s102 = sphi 0, %s99
      %s103 = sphi 0, %s102
      %s119 = sphi 0, %s103
      %s125 = sphi 0, %s127
      %s128 = sphi 0, %s125
      %s129 = sphi 0, %s128
      %s145 = sphi 0, %s129
      %s151 = sphi 0, %s153
      %s154 = sphi 0, %s151
      %s155 = sphi 0, %s154
      %s171 = sphi 0, %s155
    $region4: #{tpu_custom_call.1} parent=1 // loop_header_branch
      %17 = sbr.rel (%p15) target = $region8
    $region5: #{tpu_custom_call.1} parent=1 // loop_body
      %s19 = ssub.s32 %s14, 1
      %s20 = ssub.s32 %s14, 2
      %s30 = sadd.s32 1, %s23
      %p31 = scmp.ge.s32.totalorder %s30, 1
      %s32 = scalar_select %p31, 0, %s30
      %s33 = sadd.s32 1, %s22
      %s34 = scalar_select %p31, %s33, %s22
      %p35 = scmp.ge.s32.totalorder %s34, 2
      %s36 = scalar_select %p35, 0, %s34
      %s37 = sadd.s32 1, %s21
      %s38 = scalar_select %p35, %s37, %s21
      %p39 = scmp.ge.s32.totalorder %s38, 1
      %s40 = scalar_select %p39, 0, %s38
      %s41 = ssub.s32 %s21, %s40
      %p42 = scmp.eq.s32.totalorder %s41, 0
      %s44 = sadd.s32 %s43, 1
      %s45 = scalar_select %p42, %s43, %s44
      %p48 = pneg %p42
      %p49 = scmp.eq.s32.totalorder %s14, 1
      %p50 = por %p48, %p49
      %p51 = scmp.ne.s32.totalorder %s43, %s46
      %p52 = scmp.eq.s32.totalorder %s14, 0
      %p53 = por %p51, %p52
      %p54 = scmp.ne.s32.totalorder %s43, %s46
      %p55 = scmp.eq.s32.totalorder %s19, 1
      %p56 = por %p54, %p55
      %p57 = scmp.ne.s32.totalorder %s46, %s47
      %p58 = scmp.eq.s32.totalorder %s19, 0
      %p59 = por %p57, %p58
      %p60 = scmp.ne.s32.totalorder %s46, %s47
      %p61 = scmp.eq.s32.totalorder %s20, 1
      %p62 = por %p60, %p61
      %p64 = scmp.ne.s32.totalorder %s47, %s63
      %p65 = scmp.eq.s32.totalorder %s20, 0
      %p66 = por %p64, %p65
      %s67 = ssub.s32 1, %s22
      %s68 = smul.u32 %s67, %s23
      %s69 = ssub.s32 1, %s36
      %s70 = smul.u32 %s69, %s32
      %s71 = ssub.s32 %s68, %s70
      %p72 = scmp.eq.s32.totalorder %s71, 0
      %s74 = sadd.s32 %s73, 1
      %s75 = scalar_select %p72, %s73, %s74
      %p78 = pneg %p72
      %p79 = scmp.eq.s32.totalorder %s14, 1
      %p80 = por %p78, %p79
      %p81 = scmp.ne.s32.totalorder %s73, %s76
      %p82 = scmp.eq.s32.totalorder %s14, 0
      %p83 = por %p81, %p82
      %p84 = scmp.ne.s32.totalorder %s73, %s76
      %p85 = scmp.eq.s32.totalorder %s19, 1
      %p86 = por %p84, %p85
      %p87 = scmp.ne.s32.totalorder %s76, %s77
      %p88 = scmp.eq.s32.totalorder %s19, 0
      %p89 = por %p87, %p88
      %p90 = scmp.ne.s32.totalorder %s76, %s77
      %p91 = scmp.eq.s32.totalorder %s20, 1
      %p92 = por %p90, %p91
      %p94 = scmp.ne.s32.totalorder %s77, %s93
      %p95 = scmp.eq.s32.totalorder %s20, 0
      %p96 = por %p94, %p95
      %s97 = ssub.s32 %s21, %s40
      %p98 = scmp.eq.s32.totalorder %s97, 0
      %s100 = sadd.s32 %s99, 1
      %s101 = scalar_select %p98, %s99, %s100
      %p104 = pneg %p98
      %p105 = scmp.eq.s32.totalorder %s14, 1
      %p106 = por %p104, %p105
      %p107 = scmp.ne.s32.totalorder %s99, %s102
      %p108 = scmp.eq.s32.totalorder %s14, 0
      %p109 = por %p107, %p108
      %p110 = scmp.ne.s32.totalorder %s99, %s102
      %p111 = scmp.eq.s32.totalorder %s19, 1
      %p112 = por %p110, %p111
      %p113 = scmp.ne.s32.totalorder %s102, %s103
      %p114 = scmp.eq.s32.totalorder %s19, 0
      %p115 = por %p113, %p114
      %p116 = scmp.ne.s32.totalorder %s102, %s103
      %p117 = scmp.eq.s32.totalorder %s20, 1
      %p118 = por %p116, %p117
      %p120 = scmp.ne.s32.totalorder %s103, %s119
      %p121 = scmp.eq.s32.totalorder %s20, 0
      %p122 = por %p120, %p121
      %s123 = ssub.s32 %s23, %s32
      %p124 = scmp.eq.s32.totalorder %s123, 0
      %s126 = sadd.s32 %s125, 1
      %s127 = scalar_select %p124, %s125, %s126
      %p130 = pneg %p124
      %p131 = scmp.eq.s32.totalorder %s14, 1
      %p132 = por %p130, %p131
      %p133 = scmp.ne.s32.totalorder %s125, %s128
      %p134 = scmp.eq.s32.totalorder %s14, 0
      %p135 = por %p133, %p134
      %p136 = scmp.ne.s32.totalorder %s125, %s128
      %p137 = scmp.eq.s32.totalorder %s19, 1
      %p138 = por %p136, %p137
      %p139 = scmp.ne.s32.totalorder %s128, %s129
      %p140 = scmp.eq.s32.totalorder %s19, 0
      %p141 = por %p139, %p140
      %p142 = scmp.ne.s32.totalorder %s128, %s129
      %p143 = scmp.eq.s32.totalorder %s20, 1
      %p144 = por %p142, %p143
      %p146 = scmp.ne.s32.totalorder %s129, %s145
      %p147 = scmp.eq.s32.totalorder %s20, 0
      %p148 = por %p146, %p147
      %s149 = ssub.s32 %s21, %s40
      %p150 = scmp.eq.s32.totalorder %s149, 0
      %s152 = sadd.s32 %s151, 1
      %s153 = scalar_select %p150, %s151, %s152
      %p156 = pneg %p150
      %p157 = scmp.eq.s32.totalorder %s14, 1
      %p158 = por %p156, %p157
      %p159 = scmp.ne.s32.totalorder %s151, %s154
      %p160 = scmp.eq.s32.totalorder %s14, 0
      %p161 = por %p159, %p160
      %p162 = scmp.ne.s32.totalorder %s151, %s154
      %p163 = scmp.eq.s32.totalorder %s19, 1
      %p164 = por %p162, %p163
      %p165 = scmp.ne.s32.totalorder %s154, %s155
      %p166 = scmp.eq.s32.totalorder %s19, 0
      %p167 = por %p165, %p166
      %p168 = scmp.ne.s32.totalorder %s154, %s155
      %p169 = scmp.eq.s32.totalorder %s20, 1
      %p170 = por %p168, %p169
      %p172 = scmp.ne.s32.totalorder %s155, %s171
      %p173 = scmp.eq.s32.totalorder %s20, 0
      %p174 = por %p172, %p173
      %p175 = scmp.le.s32.totalorder 1, %s14
      %p176 = scmp.lt.s32.totalorder %s14, 3
      %p177 = pnand %p175, %p176
      %p178 = pneg %p177
      // Predicated region
      $region9: #{tpu_custom_call.1} parent=5 // pred_check
        _
      $region10: #{tpu_custom_call.1} parent=5 // pred_check_branch
        %180 = sbr.rel (%p177) target = $region12
      $region11: #{tpu_custom_call.1} parent=5 // pred_region
        %s181 = ssub.s32 %s14, 1
        // Predicated region
        $region13: #{tpu_custom_call.1} parent=11 // pred_check
          %p182 = pneg %p59
        $region14: #{tpu_custom_call.1} parent=11 // pred_check_branch
          %184 = sbr.rel (%p182) target = $region16
        $region15: #{tpu_custom_call.1} parent=11 // pred_region
          %p185 = scmp.lt.s32.totalorder %s24, 0
          %s186 = scalar_select %p185, %s24, 0
          %s187 = smul.addr %s186, 8
          %s188 = scalar_lea.vmem %s0, %s187
        $region16: #{tpu_custom_call.1} parent=11 // pred_fallthru
          _
        // Predicated region
        $region17: #{tpu_custom_call.1} parent=11 // pred_check
          %p189 = pneg %p115
        $region18: #{tpu_custom_call.1} parent=11 // pred_check_branch
          %191 = sbr.rel (%p189) target = $region20
        $region19: #{tpu_custom_call.1} parent=11 // pred_region
          %p192 = scmp.lt.s32.totalorder %s24, 0
          %s193 = scalar_select %p192, %s24, 0
          %s194 = smul.addr %s193, 8
          %s195 = scalar_lea.vmem %s2, %s194
        $region20: #{tpu_custom_call.1} parent=11 // pred_fallthru
          _
        // Predicated region
        $region21: #{tpu_custom_call.1} parent=11 // pred_check
          %p196 = pneg %p141
        $region22: #{tpu_custom_call.1} parent=11 // pred_check_branch
          %198 = sbr.rel (%p196) target = $region24
        $region23: #{tpu_custom_call.1} parent=11 // pred_region
          %p199 = scmp.lt.s32.totalorder %s26, 0
          %s200 = scalar_select %p199, %s26, 0
          %s201 = scalar_lea.vmem %s3, %s200
        $region24: #{tpu_custom_call.1} parent=11 // pred_fallthru
          _
      $region12: #{tpu_custom_call.1} parent=5 // pred_fallthru
        _
      %p202 = scmp.lt.s32.totalorder %s14, 2
      // Predicated region
      $region25: #{tpu_custom_call.1} parent=5 // pred_check
        %p203 = pneg %p202
      $region26: #{tpu_custom_call.1} parent=5 // pred_check_branch
        %205 = sbr.rel (%p203) target = $region28
      $region27: #{tpu_custom_call.1} parent=5 // pred_region
        // Predicated region
        $region29: #{tpu_custom_call.1} parent=27 // pred_check
          %p206 = pneg %p83
        $region30: #{tpu_custom_call.1} parent=27 // pred_check_branch
          %208 = sbr.rel (%p206) target = $region32
        $region31: #{tpu_custom_call.1} parent=27 // pred_region
          %s209 = sand.u32 %s73, 1
          %s210 = scalar_lea.sflag [#allocation8], %s209
          %s211 = sand.u32 %s73, 1
          %s212 = smul.addr %s211, 8
          %s213 = scalar_lea.vmem [#allocation7], %s212
          %s214 = ssub.s32 1, %s22
          %s215 = smul.u32 %s214, %s23
          %s217 = ssub.s32 128, 128
          %218 = vsyncadd %s210, %s217
          %s219 = smul.addr %s215, 128
          %s220 = scalar_lea.hbm %s1, %s219
          %s222 = sshll.u32 %s213, 4
          %s223 = int_to_ptr.vmem [resolvable:$true] %s222
          %225 = dma.hbm_to_vmem [thread:$0]  %s220, 128, %s223, %s210
        $region32: #{tpu_custom_call.1} parent=27 // pred_fallthru
          _
      $region28: #{tpu_custom_call.1} parent=5 // pred_fallthru
        _
      %p226 = scmp.le.s32.totalorder 1, %s14
      %p227 = scmp.lt.s32.totalorder %s14, 3
      %p228 = pnand %p226, %p227
      %p229 = pneg %p228
      // Predicated region
      $region33: #{tpu_custom_call.1} parent=5 // pred_check
        _
      $region34: #{tpu_custom_call.1} parent=5 // pred_check_branch
        %231 = sbr.rel (%p228) target = $region36
      $region35: #{tpu_custom_call.1} parent=5 // pred_region
        %s232 = ssub.s32 %s14, 1
        %s233 = sand.u32 %s76, 1
        %s234 = scalar_lea.sflag [#allocation8], %s233
        %s235 = sand.u32 %s76, 1
        %s236 = smul.addr %s235, 8
        %s237 = scalar_lea.vmem [#allocation7], %s236
        // Predicated region
        $region37: #{tpu_custom_call.1} parent=35 // pred_check
          %p238 = pneg %p89
        $region38: #{tpu_custom_call.1} parent=35 // pred_check_branch
          %240 = sbr.rel (%p238) target = $region40
        $region39: #{tpu_custom_call.1} parent=35 // pred_region
          %241 = dma.done %s234, 128
        $region40: #{tpu_custom_call.1} parent=35 // pred_fallthru
          _
        %p242 = scmp.lt.s32.totalorder %s24, 0
        %s243 = scalar_select %p242, %s24, 0
        %s244 = smul.addr %s243, 8
        %s245 = scalar_lea.vmem %s0, %s244
        %p246 = pneg %p59
        %p247 = pneg %p56
        %s248 = sand.u32 %s76, 1
        %s249 = scalar_lea.sflag [#allocation8], %s248
        %s250 = sand.u32 %s76, 1
        %s251 = smul.addr %s250, 8
        %s252 = scalar_lea.vmem [#allocation7], %s251
        %p253 = pneg %p89
        %p254 = pneg %p86
        %p255 = scmp.lt.s32.totalorder %s24, 0
        %s256 = scalar_select %p255, %s24, 0
        %s257 = smul.addr %s256, 8
        %s258 = scalar_lea.vmem %s2, %s257
        %p259 = pneg %p115
        %p260 = pneg %p112
        %p261 = scmp.lt.s32.totalorder %s26, 0
        %s262 = scalar_select %p261, %s26, 0
        %s263 = scalar_lea.vmem %s3, %s262
        %p264 = pneg %p141
        %p265 = pneg %p138
        %p266 = pneg %p167
        %p267 = pneg %p164
        %p268 = scmp.lt.s32.totalorder %s24, 0
        %s269 = scalar_select %p268, %s24, 0
        %s270 = smul.addr %s269, 8
        %s271 = scalar_lea.vmem %s0, %s270
        %s272 = ssub.s32 1, %s25
        %s273 = smul.u32 %s272, %s26
        %p274 = scmp.lt.s32.totalorder %s24, 0
        %s275 = scalar_select %p274, %s24, 0
        %s276 = smul.addr %s275, 8
        %s277 = scalar_lea.vmem %s2, %s276
        %p278 = scmp.lt.s32.totalorder %s26, 0
        %s279 = scalar_select %p278, %s26, 0
        %s280 = scalar_lea.vmem %s3, %s279
        %p281 = scmp.eq.s32.totalorder %s24, %s26
        %p282 = scmp.eq.s32.totalorder %s25, 0
        %p283 = scmp.eq.s32.totalorder %s26, 0
        %p284 = pnand %p282, %p283
        %p285 = pneg %p284
        // Predicated region
        $region41: #{tpu_custom_call.1} parent=35 // pred_check
          _
        $region42: #{tpu_custom_call.1} parent=35 // pred_check_branch
          %287 = sbr.rel (%p284) target = $region44
        $region43: #{tpu_custom_call.1} parent=35 // pred_region
          %vm288 = vcmask 7168
          %289 = vst.msk [vmem:[#allocation3] sm:$0xff] %vm288, -inf
        $region44: #{tpu_custom_call.1} parent=35 // pred_fallthru
          _
        // Predicated region
        $region45: #{tpu_custom_call.1} parent=35 // pred_check
          %p290 = pneg %p282
        $region46: #{tpu_custom_call.1} parent=35 // pred_check_branch
          %292 = sbr.rel (%p290) target = $region48
        $region47: #{tpu_custom_call.1} parent=35 // pred_region
          %v293 = vld [vmem:[%s271] sm:$0xff]
          %v294 = vld [vmem:[%s237] sm:$0xff]
          %295 = vmatprep.subr.mxu0 0.0
          %296 = vmatpush1.xpose.msra.mxu0 %v294
          %297 = vmatprep.subr.mxu0 0.0
          %298 = vmatpush1.xpose.msra.mxu0 0.0
          %299 = vmatprep.subr.mxu0 0.0
          %300 = vmatpush1.xpose.msra.mxu0 0.0
          %301 = vmatprep.subr.mxu0 0.0
          %302 = vmatpush1.xpose.msra.mxu0 0.0
          %303 = vmatprep.subr.mxu0 0.0
          %304 = vmatpush1.xpose.msra.mxu0 0.0
          %305 = vmatprep.subr.mxu0 0.0
          %306 = vmatpush1.xpose.msra.mxu0 0.0
          %307 = vmatprep.subr.mxu0 0.0
          %308 = vmatpush1.xpose.msra.mxu0 0.0
          %309 = vmatprep.subr.mxu0 0.0
          %310 = vmatpush1.xpose.msra.mxu0 0.0
          %311 = vmatprep.subr.mxu0 0.0
          %312 = vmatpush1.xpose.msra.mxu0 0.0
          %313 = vmatprep.subr.mxu0 0.0
          %314 = vmatpush1.xpose.msra.mxu0 0.0
          %315 = vmatprep.subr.mxu0 0.0
          %316 = vmatpush1.xpose.msra.mxu0 0.0
          %317 = vmatprep.subr.mxu0 0.0
          %318 = vmatpush1.xpose.msra.mxu0 0.0
          %319 = vmatprep.subr.mxu0 0.0
          %320 = vmatpush1.xpose.msra.mxu0 0.0
          %321 = vmatprep.subr.mxu0 0.0
          %322 = vmatpush1.xpose.msra.mxu0 0.0
          %323 = vmatprep.subr.mxu0 0.0
          %324 = vmatpush1.xpose.msra.mxu0 0.0
          %325 = vmatprep.subr.mxu0 0.0
          %326 = vmatpush1.xpose.msra.mxu0 0.0
          %327 = vmatprep.subr.mxu0 0.0
          %328 = vmatpush1.xpose.msra.mxu0 0.0
          %329 = vmatprep.subr.mxu0 0.0
          %330 = vmatpush1.xpose.msra.mxu0 0.0
          %331 = vmatprep.subr.mxu0 0.0
          %332 = vmatpush1.xpose.msra.mxu0 0.0
          %333 = vmatprep.subr.mxu0 0.0
          %334 = vmatpush1.xpose.msra.mxu0 0.0
          %335 = vmatprep.subr.mxu0 0.0
          %336 = vmatpush1.xpose.msra.mxu0 0.0
          %337 = vmatprep.subr.mxu0 0.0
          %338 = vmatpush1.xpose.msra.mxu0 0.0
          %339 = vmatprep.subr.mxu0 0.0
          %340 = vmatpush1.xpose.msra.mxu0 0.0
          %341 = vmatprep.subr.mxu0 0.0
          %342 = vmatpush1.xpose.msra.mxu0 0.0
          %343 = vmatprep.subr.mxu0 0.0
          %344 = vmatpush1.xpose.msra.mxu0 0.0
          %345 = vmatprep.subr.mxu0 0.0
          %346 = vmatpush1.xpose.msra.mxu0 0.0
          %347 = vmatprep.subr.mxu0 0.0
          %348 = vmatpush1.xpose.msra.mxu0 0.0
          %349 = vmatprep.subr.mxu0 0.0
          %350 = vmatpush1.xpose.msra.mxu0 0.0
          %351 = vmatprep.subr.mxu0 0.0
          %352 = vmatpush1.xpose.msra.mxu0 0.0
          %353 = vmatprep.subr.mxu0 0.0
          %354 = vmatpush1.xpose.msra.mxu0 0.0
          %355 = vmatprep.subr.mxu0 0.0
          %356 = vmatpush1.xpose.msra.mxu0 0.0
          %357 = vmatprep.subr.mxu0 0.0
          %358 = vmatpush1.xpose.msra.mxu0 0.0
          %359 = vmatprep.mubr.f32.mxu0 0.0
          %360 = vmatmul.mubr.f32.gmra.mrb[0].mxu0 %v293
          %v361 = vpop.f32.mrb[0].mxu0
          %v362 = vadd.f32 0.0, %v361
          %v363 = vpop.f32.mrb[0].mxu0
          %364 = vdwg.mxu0
          %s365 = smul.u32 %s26, 8
          %s366 = scalar_lea.vmem [#allocation2], %s365
          %vm367 = vcmask 64512
          %368 = vst.msk [vmem:[%s366] sm:$0xff] %vm367, %v362
          %v369 = vld [vmem:[#allocation3] sm:$0xff]
          %v370 = vsel %vm367, %v362, -inf
          %371 = vmax.xlane.f32.xlu0 %v370
          %v372 = vpop.xlane.xlu0 %371
          %v373 = vmax.f32 %v369, %v372
          %vm374 = vcmask 7168
          %375 = vst.msk [vmem:[#allocation3] sm:$0xff] %vm374, %v373
        $region48: #{tpu_custom_call.1} parent=35 // pred_fallthru
          _
        %p376 = scmp.eq.s32.totalorder %s25, 1
        %p377 = pnand %p376, %p283
        %p378 = pneg %p377
        // Predicated region
        $region49: #{tpu_custom_call.1} parent=35 // pred_check
          _
        $region50: #{tpu_custom_call.1} parent=35 // pred_check_branch
          %380 = sbr.rel (%p377) target = $region52
        $region51: #{tpu_custom_call.1} parent=35 // pred_region
          %vm381 = vcmask 7168
          %382 = vst.msk [vmem:[#allocation4] sm:$0xff] %vm381, 0.0
          %383 = vst.msk [vmem:[#allocation5] sm:$0xff] %vm381, 0.0
          %384 = vst.msk [vmem:[#allocation6] sm:$0xff] %vm381, 0.0
        $region52: #{tpu_custom_call.1} parent=35 // pred_fallthru
          _
        %p385 = pnand %p376, %p281
        %p386 = pneg %p385
        // Predicated region
        $region53: #{tpu_custom_call.1} parent=35 // pred_check
          _
        $region54: #{tpu_custom_call.1} parent=35 // pred_check_branch
          %388 = sbr.rel (%p385) target = $region56
        $region55: #{tpu_custom_call.1} parent=35 // pred_region
          %s389 = smul.u32 %s26, 8
          %s390 = scalar_lea.vmem [#allocation2], %s389
          %v391 = vld [vmem:[%s390] sm:$0xff]
          %v392 = vld [vmem:[#allocation3] sm:$0xff]
          %394 = vset.pattern.permute.xlu0 0
          %395 = vperm.xlu0 %394, %v392
          %v396 = vpop.permute.xlu0 %395
          %v398 = vsub.f32 %v391, %v396
          %v399 = vmul.f32 %v398, 14.285714
          %v400 = vmul.f32 %v399, 1.442695
          %v401 = vpow.pop %v400
          %v402 = vld [vmem:[%s277] sm:$0xff]
          %v403 = vld [vmem:[%s280] sm:$0x1]
          %404 = vset.pattern.permute.xlu0 0
          %405 = vperm.xlu0 %404, %v402
          %v406 = vpop.permute.xlu0 %405
          %v407 = vlaneseq
          %v408 = vshrl.u32 %v407, 7
          %v409 = vsub.s32 0, %v408
          %v410 = vrot.slane %v403, %v409
          %vm411 = vcmp.eq.s32.totalorder %v406, %v410
          %v412 = vlaneseq
          %v413 = vand.u32 %v412, 127
          %v414 = vstv %s389
          %v415 = vadd.s32 %v414, %v413
          %s416 = smul.u32 %s24, 8
          %v417 = vlaneseq
          %v418 = vshrl.u32 %v417, 7
          %v419 = vstv %s416
          %v420 = vadd.s32 %v419, %v418
          %vm421 = vcmp.ne.s32.totalorder %v420, %v415
          %vm422 = vmand %vm411, %vm421
          %v423 = vld [vmem:[#allocation4] sm:$0xff]
          %v424 = vsel %vm421, %v401, 0.0
          %vm425 = vcmask 64512
          %v426 = vsel %vm425, %v424, 0.0
          %427 = vadd.xlane.f32.xlu0 %v426
          %v428 = vpop.xlane.xlu0 %427
          %v429 = vadd.f32 %v423, %v428
          %vm430 = vcmask 7168
          %431 = vst.msk [vmem:[#allocation4] sm:$0xff] %vm430, %v429
          %v432 = vadd.f32 %v401, 1e-05
          %v433 = vlog2.pop %v432
          %v434 = vmul.f32 %v433, 0.6931472
          %v435 = vld [vmem:[#allocation5] sm:$0xff]
          %v436 = vsel %vm422, %v434, 0.0
          %v437 = vsel %vm425, %v436, 0.0
          %438 = vadd.xlane.f32.xlu0 %v437
          %v439 = vpop.xlane.xlu0 %438
          %v440 = vadd.f32 %v435, %v439
          %441 = vst.msk [vmem:[#allocation5] sm:$0xff] %vm430, %v440
          %v442 = vld [vmem:[#allocation6] sm:$0xff]
          %v443 = vsel %vm422, 1, 0
          %v444 = vcvt.s32.f32 %v443
          %v445 = vsel %vm425, %v444, 0.0
          %446 = vadd.xlane.f32.xlu0 %v445
          %v447 = vpop.xlane.xlu0 %446
          %v448 = vadd.f32 %v442, %v447
          %449 = vst.msk [vmem:[#allocation6] sm:$0xff] %vm430, %v448
        $region56: #{tpu_custom_call.1} parent=35 // pred_fallthru
          _
        %p450 = scmp.ne.s32.totalorder %s24, %s26
        %p451 = pnand %p376, %p450
        %p452 = pneg %p451
        // Predicated region
        $region57: #{tpu_custom_call.1} parent=35 // pred_check
          _
        $region58: #{tpu_custom_call.1} parent=35 // pred_check_branch
          %454 = sbr.rel (%p451) target = $region60
        $region59: #{tpu_custom_call.1} parent=35 // pred_region
          %s455 = smul.u32 %s26, 8
          %s456 = scalar_lea.vmem [#allocation2], %s455
          %v457 = vld [vmem:[%s456] sm:$0xff]
          %v458 = vld [vmem:[#allocation3] sm:$0xff]
          %460 = vset.pattern.permute.xlu0 0
          %461 = vperm.xlu0 %460, %v458
          %v462 = vpop.permute.xlu0 %461
          %v464 = vsub.f32 %v457, %v462
          %v465 = vmul.f32 %v464, 14.285714
          %v466 = vmul.f32 %v465, 1.442695
          %v467 = vpow.pop %v466
          %v468 = vld [vmem:[%s277] sm:$0xff]
          %v469 = vld [vmem:[%s280] sm:$0x1]
          %470 = vset.pattern.permute.xlu0 0
          %471 = vperm.xlu0 %470, %v468
          %v472 = vpop.permute.xlu0 %471
          %v473 = vlaneseq
          %v474 = vshrl.u32 %v473, 7
          %v475 = vsub.s32 0, %v474
          %v476 = vrot.slane %v469, %v475
          %vm477 = vcmp.eq.s32.totalorder %v472, %v476
          %v478 = vld [vmem:[#allocation4] sm:$0xff]
          %vm479 = vcmask 64512
          %v480 = vsel %vm479, %v467, 0.0
          %481 = vadd.xlane.f32.xlu0 %v480
          %v482 = vpop.xlane.xlu0 %481
          %v483 = vadd.f32 %v478, %v482
          %vm484 = vcmask 7168
          %485 = vst.msk [vmem:[#allocation4] sm:$0xff] %vm484, %v483
          %v486 = vadd.f32 %v467, 1e-05
          %v487 = vlog2.pop %v486
          %v488 = vmul.f32 %v487, 0.6931472
          %v489 = vld [vmem:[#allocation5] sm:$0xff]
          %v490 = vsel %vm477, %v488, 0.0
          %v491 = vsel %vm479, %v490, 0.0
          %492 = vadd.xlane.f32.xlu0 %v491
          %v493 = vpop.xlane.xlu0 %492
          %v494 = vadd.f32 %v489, %v493
          %495 = vst.msk [vmem:[#allocation5] sm:$0xff] %vm484, %v494
          %v496 = vld [vmem:[#allocation6] sm:$0xff]
          %v497 = vsel %vm477, 1, 0
          %v498 = vcvt.s32.f32 %v497
          %v499 = vsel %vm479, %v498, 0.0
          %500 = vadd.xlane.f32.xlu0 %v499
          %v501 = vpop.xlane.xlu0 %500
          %v502 = vadd.f32 %v496, %v501
          %503 = vst.msk [vmem:[#allocation6] sm:$0xff] %vm484, %v502
        $region60: #{tpu_custom_call.1} parent=35 // pred_fallthru
          _
        // Predicated region
        $region61: #{tpu_custom_call.1} parent=35 // pred_check
          _
        $region62: #{tpu_custom_call.1} parent=35 // pred_check_branch
          %505 = sbr.rel (%p377) target = $region64
        $region63: #{tpu_custom_call.1} parent=35 // pred_region
          %v506 = vld [vmem:[#allocation4] sm:$0xff]
          %v507 = vadd.f32 %v506, 7e-05
          %v508 = vlog2.pop %v507
          %v509 = vmul.f32 %v508, 0.6931472
          %v510 = vld [vmem:[#allocation5] sm:$0xff]
          %v511 = vld [vmem:[#allocation6] sm:$0xff]
          %v512 = vrcp.pop %v511
          %v513 = vmul.f32 %v510, %v512
          %v514 = vsub.f32 %v509, %v513
          %516 = vset.pattern.permute.xlu0 0
          %517 = vperm.xlu0 %516, %v514
          %v518 = vpop.permute.xlu0 %517
          %v519 = vlaneseq
          %v520 = vand.u32 %v519, 127
          %v521 = vlaneseq
          %v522 = vshrl.u32 %v521, 7
          %v523 = vsub.s32 %v520, %v522
          %v524 = vrot.slane %v518, %v523
          %vm526 = vcmask 57344
          %527 = vst.msk [vmem:[#allocation10] sm:$0x1] %vm526, %v524
        $region64: #{tpu_custom_call.1} parent=35 // pred_fallthru
          _
        // Predicated region
        $region65: #{tpu_custom_call.1} parent=35 // pred_check
          %p528 = pneg %p164
        $region66: #{tpu_custom_call.1} parent=35 // pred_check_branch
          %530 = sbr.rel (%p528) target = $region68
        $region67: #{tpu_custom_call.1} parent=35 // pred_region
          %s532 = ssub.s32 16, 16
          %533 = vsyncadd [#allocation9], %s532
          %s534 = smul.addr %s24, 16
          %s535 = scalar_lea.hbm %s4, %s534
          %s537 = sshll.u32 [#allocation10], 4
          %s538 = int_to_ptr.vmem [resolvable:$true] %s537
          %540 = dma.vmem_to_hbm [thread:$0]  %s538, 16, %s535, [#allocation9]
        $region68: #{tpu_custom_call.1} parent=35 // pred_fallthru
          _
        // Predicated region
        $region69: #{tpu_custom_call.1} parent=35 // pred_check
          %p541 = pneg %p164
        $region70: #{tpu_custom_call.1} parent=35 // pred_check_branch
          %543 = sbr.rel (%p541) target = $region72
        $region71: #{tpu_custom_call.1} parent=35 // pred_region
          %544 = dma.done [#allocation9], 16
        $region72: #{tpu_custom_call.1} parent=35 // pred_fallthru
          _
      $region36: #{tpu_custom_call.1} parent=5 // pred_fallthru
        _
      %p545 = scmp.le.s32.totalorder 2, %s14
      // Predicated region
      $region73: #{tpu_custom_call.1} parent=5 // pred_check
        %p546 = pneg %p545
      $region74: #{tpu_custom_call.1} parent=5 // pred_check_branch
        %548 = sbr.rel (%p546) target = $region76
      $region75: #{tpu_custom_call.1} parent=5 // pred_region
        %s549 = ssub.s32 %s14, 2
      $region76: #{tpu_custom_call.1} parent=5 // pred_fallthru
        _
    $region6: #{tpu_custom_call.1} parent=1 // loop_footer
      %s18 = sadd.s32 1, %s14
    $region7: #{tpu_custom_call.1} parent=1 // loop_footer_branch
      %13 = sbr.rel target = $region3
    $region8: #{tpu_custom_call.1} parent=1 // loop_exit
      _
    %550 = vsyncpa [#allocation8], 1
    %s551 = scalar_lea.sflag [#allocation8], 1
    %552 = vsyncpa %s551, 1
    %553 = vsyncpa [#allocation9], 1
    %s554 = scalar_lea.sflag [#allocation9], 1
    %555 = vsyncpa %s554, 1

</llo_original>
